<compile_context>
chip_gen: v7x
topology: tpu7x:2x2x1
jax: 0.10.0
libtpu: 0.0.40
codegen_flags: <defaults>
</compile_context>

<pallas_src>
import functools

import jax
import jax.numpy as jnp
from jax import lax
from jax.experimental import pallas as pl
from jax.experimental.pallas import tpu as pltpu


# -----------------------------------------------------------------------------
# Kernel
# -----------------------------------------------------------------------------
def _clusterer_kernel(x_ref, w_ref, b_ref, out_ref, s_ref, *, num_features):
    f = num_features
    x = x_ref[...].astype(jnp.float32)                       # (N, F)

    b_all = b_ref[...].astype(jnp.float32)                   # (5, 2F)
    b1 = b_all[0:1, :]
    b2 = b_all[1:2, :]
    b3 = b_all[2:3, :]
    gamma2 = b_all[3:4, :]                                    # [gamma | gamma]
    beta2 = b_all[4:5, :]                                     # [beta  | beta ]

    w1 = w_ref[0][:f, :]                                      # (F, 2F)  [wk1|wq1]
    w2 = w_ref[1]                                             # (2F, 2F) blkdiag(wk2, wq2)
    w3 = w_ref[2]                                             # (2F, 2F) blkdiag(wk3, wq3)

    # ---- fused layers 1-2 (dropout == identity in eval mode) ----
    h = jnp.maximum(jnp.dot(x, w1, preferred_element_type=jnp.float32) + b1, 0.0)
    h = jnp.maximum(jnp.dot(h, w2, preferred_element_type=jnp.float32) + b2, 0.0)

    # ---- shared LayerNorm (self.ln), applied per F-wide half ----
    def _ln_half(v):
        mu = jnp.mean(v, axis=-1, keepdims=True)
        msq = jnp.mean(v * v, axis=-1, keepdims=True)
        var = msq - mu * mu                                   # E[h^2] - mu^2
        return (v - mu) * lax.rsqrt(var + 1e-5)

    h_ln = jnp.concatenate([_ln_half(h[:, :f]), _ln_half(h[:, f:])], axis=-1)
    h_ln = h_ln * gamma2 + beta2                              # (N, 2F)

    # ---- fused layer 3: kq = [keys | query] ----
    kq = jnp.dot(h_ln, w3, preferred_element_type=jnp.float32) + b3  # (N, 2F)
    keys = kq[:, :f]
    query = kq[:, f:]

    # ---- similarity: query @ keys.T without materializing the transpose ----
    inv_sqrt_f = 1.0 / jnp.sqrt(jnp.float32(f))
    s = lax.dot_general(
        query, keys, (((1,), (1,)), ((), ())),
        preferred_element_type=jnp.float32) * inv_sqrt_f      # (N, N)

    # ---- softmax over dim=1 + re-aggregation ----
    m = jnp.max(s, axis=1, keepdims=True)
    e = jnp.exp(s - m)
    # approx=False keeps bit-level parity with torch.softmax behaviour.
    sims = e * pl.reciprocal(jnp.sum(e, axis=1, keepdims=True), approx=False)
    f_hat = jnp.dot(sims, x, preferred_element_type=jnp.float32)     # (N, F)

    # ---- packed, lane-dense outputs ----
    out_ref[...] = jnp.concatenate([f_hat, kq], axis=-1).astype(out_ref.dtype)
    s_ref[...] = s.astype(s_ref.dtype)


# -----------------------------------------------------------------------------
# Parameter construction / packing (done once, outside the forward)
# -----------------------------------------------------------------------------
def init_clusterer_params(key, num_features, dtype=jnp.float32):
    """Deterministic synthetic parameters matching the nn.Module shapes."""
    f = num_features
    names = ["key_hidden1", "key_hidden2", "key_hidden3",
             "query_hidden1", "query_hidden2", "query_hidden3"]
    params = {}
    keys = jax.random.split(key, 2 * len(names))
    scale = 1.0 / jnp.sqrt(jnp.float32(f))
    for i, name in enumerate(names):
        # nn.Linear stores weight as (out, in).
        params[name + "_w"] = (
            jax.random.uniform(keys[2 * i], (f, f), dtype, -1.0, 1.0) * scale)
        params[name + "_b"] = (
            jax.random.uniform(keys[2 * i + 1], (f,), dtype, -1.0, 1.0) * scale)
    params["ln_gamma"] = jnp.ones((f,), dtype)
    params["ln_beta"] = jnp.zeros((f,), dtype)
    return params


def _block_diag(a, b):
    f = a.shape[0]
    z = jnp.zeros((f, f), a.dtype)
    top = jnp.concatenate([a, z], axis=1)
    bot = jnp.concatenate([z, b], axis=1)
    return jnp.concatenate([top, bot], axis=0)


def pack_clusterer_params(params, num_features):
    """Pre-transpose and pack weights/biases once (not per forward call)."""
    f = num_features

    def wt(name):  # (out, in) -> (in, out)
        return params[name + "_w"].T

    # Layer 1: concat along output dim, zero-pad input dim to 2F for stacking.
    w1 = jnp.concatenate([wt("key_hidden1"), wt("query_hidden1")], axis=1)  # (F, 2F)
    w1 = jnp.concatenate([w1, jnp.zeros((f, 2 * f), w1.dtype)], axis=0)     # (2F, 2F)
    # Layers 2 & 3: block-diagonal.
    w2 = _block_diag(wt("key_hidden2"), wt("query_hidden2"))                # (2F, 2F)
    w3 = _block_diag(wt("key_hidden3"), wt("query_hidden3"))                # (2F, 2F)
    w_stack = jnp.stack([w1, w2, w3]).astype(jnp.float32)                   # (3, 2F, 2F)

    b1 = jnp.concatenate([params["key_hidden1_b"], params["query_hidden1_b"]])
    b2 = jnp.concatenate([params["key_hidden2_b"], params["query_hidden2_b"]])
    b3 = jnp.concatenate([params["key_hidden3_b"], params["query_hidden3_b"]])
    g2 = jnp.concatenate([params["ln_gamma"], params["ln_gamma"]])
    be2 = jnp.concatenate([params["ln_beta"], params["ln_beta"]])
    b_pack = jnp.stack([b1, b2, b3, g2, be2]).astype(jnp.float32)           # (5, 2F)

    return w_stack, b_pack


# -----------------------------------------------------------------------------
# Forward wrapper
# -----------------------------------------------------------------------------
@jax.jit
def clusterer_forward(x, w_stack, b_pack):
    n, f = x.shape

    kernel = functools.partial(_clusterer_kernel, num_features=f)

    out_shapes = (
        jax.ShapeDtypeStruct((n, 3 * f), jnp.float32),   # [F_hat | keys | query]
        jax.ShapeDtypeStruct((n, n), jnp.float32),       # S
    )

    flops = (2 * n * f * (2 * f)                 # layer 1
             + 2 * (2 * n * (2 * f) * (2 * f))   # layers 2 & 3
             + 2 * (2 * n * n * f))              # S and F_hat
    transcendentals = n * n + 2 * n              # exp + rsqrt
    bytes_accessed = 4 * (x.size + w_stack.size + b_pack.size + n * 3 * f + n * n)

    vmem = pl.BlockSpec(memory_space=pltpu.MemorySpace.VMEM)
    slab, s = pl.pallas_call(
        kernel,
        out_shape=out_shapes,
        in_specs=[vmem, vmem, vmem],
        out_specs=(pl.BlockSpec(memory_space=pltpu.MemorySpace.VMEM),
                   pl.BlockSpec(memory_space=pltpu.MemorySpace.VMEM)),
        cost_estimate=pl.CostEstimate(
            flops=int(flops),
            transcendentals=int(transcendentals),
            bytes_accessed=int(bytes_accessed)),
    )(x, w_stack, b_pack)

    f_hat = slab[:, :f]
    keys = slab[:, f:2 * f]
    query = slab[:, 2 * f:3 * f]
    return f_hat, s, keys, query


# -----------------------------------------------------------------------------
# Pure-JAX reference (mirrors the PyTorch forward) for a sanity check
# -----------------------------------------------------------------------------
def clusterer_reference(x, params):
    def lin(h, name):
        return h @ params[name + "_w"].T + params[name + "_b"]

    def ln(h):
        mu = h.mean(-1, keepdims=True)
        var = ((h - mu) ** 2).mean(-1, keepdims=True)
        return (h - mu) / jnp.sqrt(var + 1e-5) * params["ln_gamma"] + params["ln_beta"]

    keys = jax.nn.relu(lin(x, "key_hidden1"))
    keys = jax.nn.relu(lin(keys, "key_hidden2"))
    keys = lin(ln(keys), "key_hidden3")
    query = jax.nn.relu(lin(x, "query_hidden1"))
    query = jax.nn.relu(lin(query, "query_hidden2"))
    query = lin(ln(query), "query_hidden3")
    s = (query @ keys.T) / jnp.sqrt(jnp.float32(x.shape[1]))
    sims = jax.nn.softmax(s, axis=1)
    f_hat = sims @ x
    return f_hat, s, keys, query


if __name__ == "__main__":
    batch_size = 8        # N
    num_features = 32     # F

    root = jax.random.PRNGKey(0)
    k_x, k_p = jax.random.split(root)

    x = jax.random.normal(k_x, (batch_size, num_features), jnp.float32)
    params = init_clusterer_params(k_p, num_features)
    w_stack, b_pack = pack_clusterer_params(params, num_features)

    f_hat, s, keys, query = clusterer_forward(x, w_stack, b_pack)
    jax.block_until_ready((f_hat, s, keys, query))

    assert f_hat.shape == (batch_size, num_features)
    assert s.shape == (batch_size, batch_size)
    assert keys.shape == (batch_size, num_features)
    assert query.shape == (batch_size, num_features)

    # Loose-tolerance numerical sanity check against a pure-JAX reference
    # (loose to be robust to MXU matmul precision modes).
    rf, rs, rk, rq = clusterer_reference(x, params)
    for name, got, ref in (("F_hat", f_hat, rf), ("S", s, rs),
                           ("keys", keys, rk), ("query", query, rq)):
        err = float(jnp.max(jnp.abs(got - ref)))
        assert err < 5e-2, f"{name} max abs err {err}"

    print("KERNEL_OK")
</pallas_src>

<mosaic_0001>
module attributes {stable_mosaic.version = 11 : i64} {
  func.func @_clusterer_kernel(%arg0: memref<8x32xf32, #tpu.memory_space<vmem>>, %arg1: memref<3x64x64xf32, #tpu.memory_space<vmem>>, %arg2: memref<5x64xf32, #tpu.memory_space<vmem>>, %arg3: memref<8x96xf32, #tpu.memory_space<vmem>>, %arg4: memref<8x8xf32, #tpu.memory_space<vmem>>) attributes {dimension_semantics = [], scalar_prefetch = 0 : i64, scratch_operands = 0 : i64, tpu.core_type = #tpu.core_type<tc>} {
    %c0 = arith.constant 0 : index
    %c0_0 = arith.constant 0 : index
    %0 = vector.load %arg0[%c0, %c0_0] : memref<8x32xf32, #tpu.memory_space<vmem>>, vector<8x32xf32>
    %c0_1 = arith.constant 0 : index
    %c0_2 = arith.constant 0 : index
    %1 = vector.load %arg2[%c0_1, %c0_2] : memref<5x64xf32, #tpu.memory_space<vmem>>, vector<5x64xf32>
    %2 = vector.extract_strided_slice %1 {offsets = [0, 0], sizes = [1, 64], strides = [1, 1]} : vector<5x64xf32> to vector<1x64xf32>
    %3 = vector.extract_strided_slice %1 {offsets = [1, 0], sizes = [1, 64], strides = [1, 1]} : vector<5x64xf32> to vector<1x64xf32>
    %4 = vector.extract_strided_slice %1 {offsets = [2, 0], sizes = [1, 64], strides = [1, 1]} : vector<5x64xf32> to vector<1x64xf32>
    %5 = vector.extract_strided_slice %1 {offsets = [3, 0], sizes = [1, 64], strides = [1, 1]} : vector<5x64xf32> to vector<1x64xf32>
    %6 = vector.extract_strided_slice %1 {offsets = [4, 0], sizes = [1, 64], strides = [1, 1]} : vector<5x64xf32> to vector<1x64xf32>
    %c0_3 = arith.constant 0 : index
    %c0_4 = arith.constant 0 : index
    %c0_5 = arith.constant 0 : index
    %7 = vector.load %arg1[%c0_3, %c0_4, %c0_5] : memref<3x64x64xf32, #tpu.memory_space<vmem>>, vector<1x64x64xf32>
    %8 = vector.shape_cast %7 : vector<1x64x64xf32> to vector<64x64xf32>
    %9 = vector.extract_strided_slice %8 {offsets = [0, 0], sizes = [32, 64], strides = [1, 1]} : vector<64x64xf32> to vector<32x64xf32>
    %c1 = arith.constant 1 : index
    %c0_6 = arith.constant 0 : index
    %c0_7 = arith.constant 0 : index
    %10 = vector.load %arg1[%c1, %c0_6, %c0_7] : memref<3x64x64xf32, #tpu.memory_space<vmem>>, vector<1x64x64xf32>
    %11 = vector.shape_cast %10 : vector<1x64x64xf32> to vector<64x64xf32>
    %c2 = arith.constant 2 : index
    %c0_8 = arith.constant 0 : index
    %c0_9 = arith.constant 0 : index
    %12 = vector.load %arg1[%c2, %c0_8, %c0_9] : memref<3x64x64xf32, #tpu.memory_space<vmem>>, vector<1x64x64xf32>
    %13 = vector.shape_cast %12 : vector<1x64x64xf32> to vector<64x64xf32>
    %cst = arith.constant dense<0.000000e+00> : vector<8x64xf32>
    %14 = tpu.matmul %0, %9, %cst {dimension_numbers = #tpu.dot_dimension_numbers<[1], [0], [0], [1], [0, 0, 1, 1], [], []>} : vector<8x32xf32>, vector<32x64xf32>, vector<8x64xf32> -> vector<8x64xf32>
    %15 = vector.broadcast %2 : vector<1x64xf32> to vector<8x64xf32>
    %16 = arith.addf %14, %15 : vector<8x64xf32>
    %cst_10 = arith.constant 0.000000e+00 : f32
    %17 = vector.broadcast %cst_10 : f32 to vector<8x64xf32>
    %18 = arith.maximumf %16, %17 : vector<8x64xf32>
    %cst_11 = arith.constant dense<0.000000e+00> : vector<8x64xf32>
    %19 = tpu.matmul %18, %11, %cst_11 {dimension_numbers = #tpu.dot_dimension_numbers<[1], [0], [0], [1], [0, 0, 1, 1], [], []>} : vector<8x64xf32>, vector<64x64xf32>, vector<8x64xf32> -> vector<8x64xf32>
    %20 = vector.broadcast %3 : vector<1x64xf32> to vector<8x64xf32>
    %21 = arith.addf %19, %20 : vector<8x64xf32>
    %cst_12 = arith.constant 0.000000e+00 : f32
    %22 = vector.broadcast %cst_12 : f32 to vector<8x64xf32>
    %23 = arith.maximumf %21, %22 : vector<8x64xf32>
    %24 = vector.extract_strided_slice %23 {offsets = [0, 0], sizes = [8, 32], strides = [1, 1]} : vector<8x64xf32> to vector<8x32xf32>
    %cst_13 = arith.constant dense<0.000000e+00> : vector<8xf32>
    %25 = vector.multi_reduction <add>, %24, %cst_13 [1] : vector<8x32xf32> to vector<8xf32>
    %26 = vector.shape_cast %25 : vector<8xf32> to vector<8x1xf32>
    %cst_14 = arith.constant 3.200000e+01 : f32
    %27 = vector.broadcast %cst_14 : f32 to vector<8x1xf32>
    %28 = arith.divf %26, %27 : vector<8x1xf32>
    %29 = arith.mulf %24, %24 : vector<8x32xf32>
    %cst_15 = arith.constant dense<0.000000e+00> : vector<8xf32>
    %30 = vector.multi_reduction <add>, %29, %cst_15 [1] : vector<8x32xf32> to vector<8xf32>
    %31 = vector.shape_cast %30 : vector<8xf32> to vector<8x1xf32>
    %cst_16 = arith.constant 3.200000e+01 : f32
    %32 = vector.broadcast %cst_16 : f32 to vector<8x1xf32>
    %33 = arith.divf %31, %32 : vector<8x1xf32>
    %34 = arith.mulf %28, %28 : vector<8x1xf32>
    %35 = arith.subf %33, %34 : vector<8x1xf32>
    %36 = vector.broadcast %28 : vector<8x1xf32> to vector<8x32xf32>
    %37 = arith.subf %24, %36 : vector<8x32xf32>
    %cst_17 = arith.constant 9.99999974E-6 : f32
    %38 = vector.broadcast %cst_17 : f32 to vector<8x1xf32>
    %39 = arith.addf %35, %38 : vector<8x1xf32>
    %40 = math.rsqrt %39 : vector<8x1xf32>
    %41 = vector.broadcast %40 : vector<8x1xf32> to vector<8x32xf32>
    %42 = arith.mulf %37, %41 : vector<8x32xf32>
    %43 = vector.extract_strided_slice %23 {offsets = [0, 32], sizes = [8, 32], strides = [1, 1]} : vector<8x64xf32> to vector<8x32xf32>
    %cst_18 = arith.constant dense<0.000000e+00> : vector<8xf32>
    %44 = vector.multi_reduction <add>, %43, %cst_18 [1] : vector<8x32xf32> to vector<8xf32>
    %45 = vector.shape_cast %44 : vector<8xf32> to vector<8x1xf32>
    %cst_19 = arith.constant 3.200000e+01 : f32
    %46 = vector.broadcast %cst_19 : f32 to vector<8x1xf32>
    %47 = arith.divf %45, %46 : vector<8x1xf32>
    %48 = arith.mulf %43, %43 : vector<8x32xf32>
    %cst_20 = arith.constant dense<0.000000e+00> : vector<8xf32>
    %49 = vector.multi_reduction <add>, %48, %cst_20 [1] : vector<8x32xf32> to vector<8xf32>
    %50 = vector.shape_cast %49 : vector<8xf32> to vector<8x1xf32>
    %cst_21 = arith.constant 3.200000e+01 : f32
    %51 = vector.broadcast %cst_21 : f32 to vector<8x1xf32>
    %52 = arith.divf %50, %51 : vector<8x1xf32>
    %53 = arith.mulf %47, %47 : vector<8x1xf32>
    %54 = arith.subf %52, %53 : vector<8x1xf32>
    %55 = vector.broadcast %47 : vector<8x1xf32> to vector<8x32xf32>
    %56 = arith.subf %43, %55 : vector<8x32xf32>
    %cst_22 = arith.constant 9.99999974E-6 : f32
    %57 = vector.broadcast %cst_22 : f32 to vector<8x1xf32>
    %58 = arith.addf %54, %57 : vector<8x1xf32>
    %59 = math.rsqrt %58 : vector<8x1xf32>
    %60 = vector.broadcast %59 : vector<8x1xf32> to vector<8x32xf32>
    %61 = arith.mulf %56, %60 : vector<8x32xf32>
    %62 = tpu.concatenate %42, %61 in 1 : vector<8x32xf32>, vector<8x32xf32> -> vector<8x64xf32>
    %63 = vector.broadcast %5 : vector<1x64xf32> to vector<8x64xf32>
    %64 = arith.mulf %62, %63 : vector<8x64xf32>
    %65 = vector.broadcast %6 : vector<1x64xf32> to vector<8x64xf32>
    %66 = arith.addf %64, %65 : vector<8x64xf32>
    %cst_23 = arith.constant dense<0.000000e+00> : vector<8x64xf32>
    %67 = tpu.matmul %66, %13, %cst_23 {dimension_numbers = #tpu.dot_dimension_numbers<[1], [0], [0], [1], [0, 0, 1, 1], [], []>} : vector<8x64xf32>, vector<64x64xf32>, vector<8x64xf32> -> vector<8x64xf32>
    %68 = vector.broadcast %4 : vector<1x64xf32> to vector<8x64xf32>
    %69 = arith.addf %67, %68 : vector<8x64xf32>
    %70 = vector.extract_strided_slice %69 {offsets = [0, 0], sizes = [8, 32], strides = [1, 1]} : vector<8x64xf32> to vector<8x32xf32>
    %71 = vector.extract_strided_slice %69 {offsets = [0, 32], sizes = [8, 32], strides = [1, 1]} : vector<8x64xf32> to vector<8x32xf32>
    %cst_24 = arith.constant 3.200000e+01 : f32
    %72 = math.sqrt %cst_24 : f32
    %cst_25 = arith.constant 1.000000e+00 : f32
    %73 = arith.divf %cst_25, %72 : f32
    %cst_26 = arith.constant dense<0.000000e+00> : vector<8x8xf32>
    %74 = tpu.matmul %71, %70, %cst_26 {dimension_numbers = #tpu.dot_dimension_numbers<[1], [1], [0], [0], [0, 0, 1, 0], [], []>} : vector<8x32xf32>, vector<8x32xf32>, vector<8x8xf32> -> vector<8x8xf32>
    %75 = vector.broadcast %73 : f32 to vector<8x8xf32>
    %76 = arith.mulf %74, %75 : vector<8x8xf32>
    %cst_27 = arith.constant dense<0xFF800000> : vector<8xf32>
    %77 = vector.multi_reduction <maximumf>, %76, %cst_27 [1] : vector<8x8xf32> to vector<8xf32>
    %78 = vector.shape_cast %77 : vector<8xf32> to vector<8x1xf32>
    %79 = vector.broadcast %78 : vector<8x1xf32> to vector<8x8xf32>
    %80 = arith.subf %76, %79 : vector<8x8xf32>
    %81 = math.exp %80 : vector<8x8xf32>
    %cst_28 = arith.constant dense<0.000000e+00> : vector<8xf32>
    %82 = vector.multi_reduction <add>, %81, %cst_28 [1] : vector<8x8xf32> to vector<8xf32>
    %83 = vector.shape_cast %82 : vector<8xf32> to vector<8x1xf32>
    %84 = tpu.reciprocal %83 : vector<8x1xf32> -> vector<8x1xf32>
    %85 = vector.broadcast %84 : vector<8x1xf32> to vector<8x8xf32>
    %86 = arith.mulf %81, %85 : vector<8x8xf32>
    %cst_29 = arith.constant dense<0.000000e+00> : vector<8x32xf32>
    %87 = tpu.matmul %86, %0, %cst_29 {dimension_numbers = #tpu.dot_dimension_numbers<[1], [0], [0], [1], [0, 0, 1, 1], [], []>} : vector<8x8xf32>, vector<8x32xf32>, vector<8x32xf32> -> vector<8x32xf32>
    %88 = tpu.concatenate %87, %69 in 1 : vector<8x32xf32>, vector<8x64xf32> -> vector<8x96xf32>
    %c0_30 = arith.constant 0 : index
    %c0_31 = arith.constant 0 : index
    %89 = vector.load %arg3[%c0_30, %c0_31] : memref<8x96xf32, #tpu.memory_space<vmem>>, vector<8x96xf32>
    tpu.vector_store %arg3[%c0_30, %c0_31], %88 {strides = array<i32>} : memref<8x96xf32, #tpu.memory_space<vmem>>, vector<8x96xf32>,
    %c0_32 = arith.constant 0 : index
    %c0_33 = arith.constant 0 : index
    %90 = vector.load %arg4[%c0_32, %c0_33] : memref<8x8xf32, #tpu.memory_space<vmem>>, vector<8x8xf32>
    tpu.vector_store %arg4[%c0_32, %c0_33], %76 {strides = array<i32>} : memref<8x8xf32, #tpu.memory_space<vmem>>, vector<8x8xf32>,
    return
  }
}

</mosaic_0001>

<llo_original>
// kernel: clusterer_forward.1
$region0: #{clusterer_forward.1}
  #allocation0 [shape = 'u32[]', space=smem, size = 0x4, offset = 0x4, fixed_abs, tag = 'smem constant byte address 0x4 - core index']
  #allocation1 [shape = 'u32[144,128]{1,0:T(1,128)}', space=vmem, size = 0x12000, scoped, tag = 'internal scratch']
  %s0 = inlined_call_operand.hbm [shape: f32[8,32], index: 0, kind: input, shape index: {}]
  %s1 = inlined_call_operand.hbm [shape: f32[3,64,64], index: 1, kind: input, shape index: {}]
  %s2 = inlined_call_operand.hbm [shape: f32[5,64], index: 2, kind: input, shape index: {}]
  %s3 = inlined_call_operand.vmem [shape: f32[8,96], index: 3, kind: output, shape index: {0}]
  %s4 = inlined_call_operand.hbm [shape: f32[8,8], index: 4, kind: output, shape index: {1}]
  %5 = xla_tuple %s3, %s4
  %s6 = sld [smem:[#allocation0]]
  $region42: #{clusterer_forward.1} parent=0
    _
  %s8 = ssub.s32 1, %s6
  %s9 = scalar_select 0, %s8, %s6
  $region1: #{clusterer_forward.1} parent=0
    #allocation2 [shape = 'u8[4096]{0}', space=vmem, size = 0x1000, scoped, tag = 'input window, operand 0, single buffered']
    #allocation3 [shape = 's32[1]{0}', space=sflag, size = 0x4, scoped, tag = 'scoped memory for clusterer_forward.1']
    #allocation4 [shape = 's32[1]{0}', space=sflag, size = 0x4, scoped, tag = 'scoped memory for clusterer_forward.1']
    #allocation5 [shape = 'u8[98304]{0}', space=vmem, size = 0x18000, scoped, tag = 'input window, operand 1, single buffered']
    #allocation6 [shape = 's32[1]{0}', space=sflag, size = 0x4, scoped, tag = 'scoped memory for clusterer_forward.1']
    #allocation7 [shape = 'u8[4096]{0}', space=vmem, size = 0x1000, scoped, tag = 'input window, operand 2, single buffered']
    #allocation8 [shape = 'u8[4096]{0}', space=vmem, size = 0x1000, scoped, tag = 'output window, operand 1, single buffered']
    %10 = vsyncpa [#allocation3], 0
    %11 = vsyncpa [#allocation6], 0
    %12 = vsyncpa [#allocation4], 0
    // Predicated region
    $region2: #{clusterer_forward.1} parent=1 // pred_check
      _
    $region3: #{clusterer_forward.1} parent=1 // pred_check_branch
      %14 = sbr.rel (0) target = $region5
    $region4: #{clusterer_forward.1} parent=1 // pred_region
      %s16 = ssub.s32 128, 128
      %17 = vsyncadd [#allocation3], %s16
      %s19 = sshll.u32 [#allocation2], 4
      %s20 = int_to_ptr.vmem [resolvable:$true] %s19
      %22 = dma.hbm_to_vmem [thread:$0]  %s0, 128, %s20, [#allocation3]
    $region5: #{clusterer_forward.1} parent=1 // pred_fallthru
      _
    // Predicated region
    $region6: #{clusterer_forward.1} parent=1 // pred_check
      _
    $region7: #{clusterer_forward.1} parent=1 // pred_check_branch
      %24 = sbr.rel (0) target = $region9
    $region8: #{clusterer_forward.1} parent=1 // pred_region
      %s26 = ssub.s32 3072, 3072
      %27 = vsyncadd [#allocation6], %s26
      %s28 = sshll.u32 [#allocation5], 4
      %s29 = int_to_ptr.vmem [resolvable:$true] %s28
      %34 = dma.hbm_to_vmem [thread:$0]  %s1, 3072, %s29, [#allocation6], 128, 128, 8
    $region9: #{clusterer_forward.1} parent=1 // pred_fallthru
      _
    // Predicated region
    $region10: #{clusterer_forward.1} parent=1 // pred_check
      _
    $region11: #{clusterer_forward.1} parent=1 // pred_check_branch
      %36 = sbr.rel (0) target = $region13
    $region12: #{clusterer_forward.1} parent=1 // pred_region
      %s38 = ssub.s32 128, 128
      %39 = vsyncadd [#allocation6], %s38
      %s41 = sshll.u32 [#allocation7], 4
      %s42 = int_to_ptr.vmem [resolvable:$true] %s41
      %44 = dma.hbm_to_vmem [thread:$0]  %s2, 128, %s42, [#allocation6]
    $region13: #{clusterer_forward.1} parent=1 // pred_fallthru
      _
    // Predicated region
    $region14: #{clusterer_forward.1} parent=1 // pred_check
      _
    $region15: #{clusterer_forward.1} parent=1 // pred_check_branch
      %46 = sbr.rel (0) target = $region17
    $region16: #{clusterer_forward.1} parent=1 // pred_region
      %47 = dma.done [#allocation3], 128
    $region17: #{clusterer_forward.1} parent=1 // pred_fallthru
      _
    // Predicated region
    $region18: #{clusterer_forward.1} parent=1 // pred_check
      _
    $region19: #{clusterer_forward.1} parent=1 // pred_check_branch
      %49 = sbr.rel (0) target = $region21
    $region20: #{clusterer_forward.1} parent=1 // pred_region
      %50 = dma.done [#allocation6], 3072
    $region21: #{clusterer_forward.1} parent=1 // pred_fallthru
      _
    // Predicated region
    $region22: #{clusterer_forward.1} parent=1 // pred_check
      _
    $region23: #{clusterer_forward.1} parent=1 // pred_check_branch
      %52 = sbr.rel (0) target = $region25
    $region24: #{clusterer_forward.1} parent=1 // pred_region
      %53 = dma.done [#allocation6], 128
    $region25: #{clusterer_forward.1} parent=1 // pred_fallthru
      _
    %v54 = vld [vmem:[#allocation2] sm:$0xff]
    %v55 = vld [vmem:[#allocation7] sm:$0x1f]
    %v56 = vld [vmem:[#allocation5] sm:$0xff]
    %v57 = vld [vmem:[#allocation5 + $0x8] sm:$0xff]
    %v58 = vld [vmem:[#allocation5 + $0x10] sm:$0xff]
    %v59 = vld [vmem:[#allocation5 + $0x18] sm:$0xff]
    %s60 = scalar_lea.vmem [#allocation5], 64
    %v61 = vld [vmem:[%s60] sm:$0xff]
    %v62 = vld [vmem:[%s60 + $0x8] sm:$0xff]
    %v63 = vld [vmem:[%s60 + $0x10] sm:$0xff]
    %v64 = vld [vmem:[%s60 + $0x18] sm:$0xff]
    %v65 = vld [vmem:[%s60 + $0x20] sm:$0xff]
    %v66 = vld [vmem:[%s60 + $0x28] sm:$0xff]
    %v67 = vld [vmem:[%s60 + $0x30] sm:$0xff]
    %v68 = vld [vmem:[%s60 + $0x38] sm:$0xff]
    %s69 = scalar_lea.vmem [#allocation5], 128
    %v70 = vld [vmem:[%s69] sm:$0xff]
    %v71 = vld [vmem:[%s69 + $0x8] sm:$0xff]
    %v72 = vld [vmem:[%s69 + $0x10] sm:$0xff]
    %v73 = vld [vmem:[%s69 + $0x18] sm:$0xff]
    %v74 = vld [vmem:[%s69 + $0x20] sm:$0xff]
    %v75 = vld [vmem:[%s69 + $0x28] sm:$0xff]
    %v76 = vld [vmem:[%s69 + $0x30] sm:$0xff]
    %v77 = vld [vmem:[%s69 + $0x38] sm:$0xff]
    %v78 = vlaneseq
    %v79 = vshrl.u32 %v78, 7
    %v80 = vsub.s32 0, %v79
    %v81 = vrot.slane %v55, %v80
    %vm82 = vcmask 261120
    %v84 = vsel %vm82, %v54, 0
    %86 = vmatprep.subr.mxu0 0.0
    %87 = vmatpush1.msra.mxu0 %v56
    %88 = vmatprep.subr.mxu0 0.0
    %89 = vmatpush1.msra.mxu0 %v57
    %90 = vmatprep.subr.mxu0 0.0
    %91 = vmatpush1.msra.mxu0 %v58
    %92 = vmatprep.subr.mxu0 0.0
    %93 = vmatpush1.msra.mxu0 %v59
    %94 = vmatprep.subr.mxu0 0.0
    %95 = vmatpush1.msra.mxu0 0.0
    %96 = vmatprep.subr.mxu0 0.0
    %97 = vmatpush1.msra.mxu0 0.0
    %98 = vmatprep.subr.mxu0 0.0
    %99 = vmatpush1.msra.mxu0 0.0
    %100 = vmatprep.subr.mxu0 0.0
    %101 = vmatpush1.msra.mxu0 0.0
    %102 = vmatprep.subr.mxu0 0.0
    %103 = vmatpush1.msra.mxu0 0.0
    %104 = vmatprep.subr.mxu0 0.0
    %105 = vmatpush1.msra.mxu0 0.0
    %106 = vmatprep.subr.mxu0 0.0
    %107 = vmatpush1.msra.mxu0 0.0
    %108 = vmatprep.subr.mxu0 0.0
    %109 = vmatpush1.msra.mxu0 0.0
    %110 = vmatprep.subr.mxu0 0.0
    %111 = vmatpush1.msra.mxu0 0.0
    %112 = vmatprep.subr.mxu0 0.0
    %113 = vmatpush1.msra.mxu0 0.0
    %114 = vmatprep.subr.mxu0 0.0
    %115 = vmatpush1.msra.mxu0 0.0
    %116 = vmatprep.subr.mxu0 0.0
    %117 = vmatpush1.msra.mxu0 0.0
    %118 = vmatprep.subr.mxu0 0.0
    %119 = vmatpush1.msra.mxu0 0.0
    %120 = vmatprep.subr.mxu0 0.0
    %121 = vmatpush1.msra.mxu0 0.0
    %122 = vmatprep.subr.mxu0 0.0
    %123 = vmatpush1.msra.mxu0 0.0
    %124 = vmatprep.subr.mxu0 0.0
    %125 = vmatpush1.msra.mxu0 0.0
    %126 = vmatprep.subr.mxu0 0.0
    %127 = vmatpush1.msra.mxu0 0.0
    %128 = vmatprep.subr.mxu0 0.0
    %129 = vmatpush1.msra.mxu0 0.0
    %130 = vmatprep.subr.mxu0 0.0
    %131 = vmatpush1.msra.mxu0 0.0
    %132 = vmatprep.subr.mxu0 0.0
    %133 = vmatpush1.msra.mxu0 0.0
    %134 = vmatprep.subr.mxu0 0.0
    %135 = vmatpush1.msra.mxu0 0.0
    %136 = vmatprep.subr.mxu0 0.0
    %137 = vmatpush1.msra.mxu0 0.0
    %138 = vmatprep.subr.mxu0 0.0
    %139 = vmatpush1.msra.mxu0 0.0
    %140 = vmatprep.subr.mxu0 0.0
    %141 = vmatpush1.msra.mxu0 0.0
    %142 = vmatprep.subr.mxu0 0.0
    %143 = vmatpush1.msra.mxu0 0.0
    %144 = vmatprep.subr.mxu0 0.0
    %145 = vmatpush1.msra.mxu0 0.0
    %146 = vmatprep.subr.mxu0 0.0
    %147 = vmatpush1.msra.mxu0 0.0
    %148 = vmatprep.subr.mxu0 0.0
    %149 = vmatpush1.msra.mxu0 0.0
    %150 = vmatprep.mubr.f32.mxu0 0.0
    %151 = vmatmul.mubr.f32.gmra.mrb[0].mxu0 %v84
    %v152 = vpop.f32.mrb[0].mxu0
    %v153 = vadd.f32 %v81, %v152
    %v154 = vpop.f32.mrb[0].mxu0
    %155 = vdwg.mxu0
    %v156 = vmax.f32 %v153, 0.0
    %v157 = vlaneseq
    %v158 = vshrl.u32 %v157, 7
    %v159 = vsub.s32 1, %v158
    %v160 = vrot.slane %v55, %v159
    %vm161 = vcmask 523264
    %v163 = vsel %vm161, %v156, 0
    %165 = vmatprep.subr.mxu0 0.0
    %166 = vmatpush1.msra.mxu0 %v61
    %167 = vmatprep.subr.mxu0 0.0
    %168 = vmatpush1.msra.mxu0 %v62
    %169 = vmatprep.subr.mxu0 0.0
    %170 = vmatpush1.msra.mxu0 %v63
    %171 = vmatprep.subr.mxu0 0.0
    %172 = vmatpush1.msra.mxu0 %v64
    %173 = vmatprep.subr.mxu0 0.0
    %174 = vmatpush1.msra.mxu0 %v65
    %175 = vmatprep.subr.mxu0 0.0
    %176 = vmatpush1.msra.mxu0 %v66
    %177 = vmatprep.subr.mxu0 0.0
    %178 = vmatpush1.msra.mxu0 %v67
    %179 = vmatprep.subr.mxu0 0.0
    %180 = vmatpush1.msra.mxu0 %v68
    %181 = vmatprep.subr.mxu0 0.0
    %182 = vmatpush1.msra.mxu0 0.0
    %183 = vmatprep.subr.mxu0 0.0
    %184 = vmatpush1.msra.mxu0 0.0
    %185 = vmatprep.subr.mxu0 0.0
    %186 = vmatpush1.msra.mxu0 0.0
    %187 = vmatprep.subr.mxu0 0.0
    %188 = vmatpush1.msra.mxu0 0.0
    %189 = vmatprep.subr.mxu0 0.0
    %190 = vmatpush1.msra.mxu0 0.0
    %191 = vmatprep.subr.mxu0 0.0
    %192 = vmatpush1.msra.mxu0 0.0
    %193 = vmatprep.subr.mxu0 0.0
    %194 = vmatpush1.msra.mxu0 0.0
    %195 = vmatprep.subr.mxu0 0.0
    %196 = vmatpush1.msra.mxu0 0.0
    %197 = vmatprep.subr.mxu0 0.0
    %198 = vmatpush1.msra.mxu0 0.0
    %199 = vmatprep.subr.mxu0 0.0
    %200 = vmatpush1.msra.mxu0 0.0
    %201 = vmatprep.subr.mxu0 0.0
    %202 = vmatpush1.msra.mxu0 0.0
    %203 = vmatprep.subr.mxu0 0.0
    %204 = vmatpush1.msra.mxu0 0.0
    %205 = vmatprep.subr.mxu0 0.0
    %206 = vmatpush1.msra.mxu0 0.0
    %207 = vmatprep.subr.mxu0 0.0
    %208 = vmatpush1.msra.mxu0 0.0
    %209 = vmatprep.subr.mxu0 0.0
    %210 = vmatpush1.msra.mxu0 0.0
    %211 = vmatprep.subr.mxu0 0.0
    %212 = vmatpush1.msra.mxu0 0.0
    %213 = vmatprep.subr.mxu0 0.0
    %214 = vmatpush1.msra.mxu0 0.0
    %215 = vmatprep.subr.mxu0 0.0
    %216 = vmatpush1.msra.mxu0 0.0
    %217 = vmatprep.subr.mxu0 0.0
    %218 = vmatpush1.msra.mxu0 0.0
    %219 = vmatprep.subr.mxu0 0.0
    %220 = vmatpush1.msra.mxu0 0.0
    %221 = vmatprep.subr.mxu0 0.0
    %222 = vmatpush1.msra.mxu0 0.0
    %223 = vmatprep.subr.mxu0 0.0
    %224 = vmatpush1.msra.mxu0 0.0
    %225 = vmatprep.subr.mxu0 0.0
    %226 = vmatpush1.msra.mxu0 0.0
    %227 = vmatprep.subr.mxu0 0.0
    %228 = vmatpush1.msra.mxu0 0.0
    %229 = vmatprep.mubr.f32.mxu0 0.0
    %230 = vmatmul.mubr.f32.gmra.mrb[0].mxu0 %v163
    %v231 = vpop.f32.mrb[0].mxu0
    %v232 = vadd.f32 %v160, %v231
    %v233 = vpop.f32.mrb[0].mxu0
    %234 = vdwg.mxu0
    %v235 = vmax.f32 %v232, 0.0
    %v236 = vsel %vm82, %v235, 0.0
    %237 = vadd.xlane.f32.xlu0 %v236
    %v238 = vpop.xlane.xlu0 %237
    %v239 = vrcp.pop 32.0
    %v240 = vmul.f32 %v238, %v239
    %v241 = vmul.f32 %v235, %v235
    %v242 = vsel %vm82, %v241, 0.0
    %243 = vadd.xlane.f32.xlu0 %v242
    %v244 = vpop.xlane.xlu0 %243
    %v245 = vmul.f32 %v244, %v239
    %v246 = vmul.f32 %v240, %v240
    %v247 = vsub.f32 %v245, %v246
    %v248 = vsub.f32 %v235, %v240
    %v249 = vadd.f32 %v247, 1e-05
    %v250 = vrsqrt.pop %v249
    %v251 = vmul.f32 %v248, %v250
    %253 = vrot.lane.b32.xlu0 %v235, 96
    %v254 = vpop.permute.xlu0 %253
    %v256 = vsel %vm82, %v254, 0.0
    %257 = vadd.xlane.f32.xlu0 %v256
    %v258 = vpop.xlane.xlu0 %257
    %v259 = vmul.f32 %v258, %v239
    %261 = vrot.lane.b32.xlu0 %v241, 96
    %v262 = vpop.permute.xlu0 %261
    %v264 = vsel %vm82, %v262, 0.0
    %265 = vadd.xlane.f32.xlu0 %v264
    %v266 = vpop.xlane.xlu0 %265
    %v267 = vmul.f32 %v266, %v239
    %v268 = vmul.f32 %v259, %v259
    %v269 = vsub.f32 %v267, %v268
    %v270 = vsub.f32 %v235, %v259
    %v271 = vadd.f32 %v269, 1e-05
    %v272 = vrsqrt.pop %v271
    %v273 = vmul.f32 %v270, %v272
    %v274 = vsel %vm82, %v251, %v273
    %v275 = vlaneseq
    %v276 = vshrl.u32 %v275, 7
    %v277 = vsub.s32 3, %v276
    %v278 = vrot.slane %v55, %v277
    %v279 = vmul.f32 %v274, %v278
    %v280 = vlaneseq
    %v281 = vshrl.u32 %v280, 7
    %v282 = vsub.s32 4, %v281
    %v283 = vrot.slane %v55, %v282
    %v284 = vadd.f32 %v279, %v283
    %v285 = vlaneseq
    %v286 = vshrl.u32 %v285, 7
    %v287 = vsub.s32 2, %v286
    %v288 = vrot.slane %v55, %v287
    %v290 = vsel %vm161, %v284, 0
    %292 = vmatprep.subr.mxu0 0.0
    %293 = vmatpush1.msra.mxu0 %v70
    %294 = vmatprep.subr.mxu0 0.0
    %295 = vmatpush1.msra.mxu0 %v71
    %296 = vmatprep.subr.mxu0 0.0
    %297 = vmatpush1.msra.mxu0 %v72
    %298 = vmatprep.subr.mxu0 0.0
    %299 = vmatpush1.msra.mxu0 %v73
    %300 = vmatprep.subr.mxu0 0.0
    %301 = vmatpush1.msra.mxu0 %v74
    %302 = vmatprep.subr.mxu0 0.0
    %303 = vmatpush1.msra.mxu0 %v75
    %304 = vmatprep.subr.mxu0 0.0
    %305 = vmatpush1.msra.mxu0 %v76
    %306 = vmatprep.subr.mxu0 0.0
    %307 = vmatpush1.msra.mxu0 %v77
    %308 = vmatprep.subr.mxu0 0.0
    %309 = vmatpush1.msra.mxu0 0.0
    %310 = vmatprep.subr.mxu0 0.0
    %311 = vmatpush1.msra.mxu0 0.0
    %312 = vmatprep.subr.mxu0 0.0
    %313 = vmatpush1.msra.mxu0 0.0
    %314 = vmatprep.subr.mxu0 0.0
    %315 = vmatpush1.msra.mxu0 0.0
    %316 = vmatprep.subr.mxu0 0.0
    %317 = vmatpush1.msra.mxu0 0.0
    %318 = vmatprep.subr.mxu0 0.0
    %319 = vmatpush1.msra.mxu0 0.0
    %320 = vmatprep.subr.mxu0 0.0
    %321 = vmatpush1.msra.mxu0 0.0
    %322 = vmatprep.subr.mxu0 0.0
    %323 = vmatpush1.msra.mxu0 0.0
    %324 = vmatprep.subr.mxu0 0.0
    %325 = vmatpush1.msra.mxu0 0.0
    %326 = vmatprep.subr.mxu0 0.0
    %327 = vmatpush1.msra.mxu0 0.0
    %328 = vmatprep.subr.mxu0 0.0
    %329 = vmatpush1.msra.mxu0 0.0
    %330 = vmatprep.subr.mxu0 0.0
    %331 = vmatpush1.msra.mxu0 0.0
    %332 = vmatprep.subr.mxu0 0.0
    %333 = vmatpush1.msra.mxu0 0.0
    %334 = vmatprep.subr.mxu0 0.0
    %335 = vmatpush1.msra.mxu0 0.0
    %336 = vmatprep.subr.mxu0 0.0
    %337 = vmatpush1.msra.mxu0 0.0
    %338 = vmatprep.subr.mxu0 0.0
    %339 = vmatpush1.msra.mxu0 0.0
    %340 = vmatprep.subr.mxu0 0.0
    %341 = vmatpush1.msra.mxu0 0.0
    %342 = vmatprep.subr.mxu0 0.0
    %343 = vmatpush1.msra.mxu0 0.0
    %344 = vmatprep.subr.mxu0 0.0
    %345 = vmatpush1.msra.mxu0 0.0
    %346 = vmatprep.subr.mxu0 0.0
    %347 = vmatpush1.msra.mxu0 0.0
    %348 = vmatprep.subr.mxu0 0.0
    %349 = vmatpush1.msra.mxu0 0.0
    %350 = vmatprep.subr.mxu0 0.0
    %351 = vmatpush1.msra.mxu0 0.0
    %352 = vmatprep.subr.mxu0 0.0
    %353 = vmatpush1.msra.mxu0 0.0
    %354 = vmatprep.subr.mxu0 0.0
    %355 = vmatpush1.msra.mxu0 0.0
    %356 = vmatprep.mubr.f32.mxu0 0.0
    %357 = vmatmul.mubr.f32.gmra.mrb[0].mxu0 %v290
    %v358 = vpop.f32.mrb[0].mxu0
    %v359 = vadd.f32 %v288, %v358
    %v360 = vpop.f32.mrb[0].mxu0
    %361 = vdwg.mxu0
    %363 = vrot.lane.b32.xlu0 %v359, 96
    %v364 = vpop.permute.xlu0 %363
    %v365 = vsel %vm82, %v364, 0
    %v367 = vsel %vm82, %v359, 0
    %369 = vmatprep.subr.mxu0 0.0
    %370 = vmatpush1.xpose.msra.mxu0 %v367
    %371 = vmatprep.subr.mxu0 0.0
    %372 = vmatpush1.xpose.msra.mxu0 0.0
    %373 = vmatprep.subr.mxu0 0.0
    %374 = vmatpush1.xpose.msra.mxu0 0.0
    %375 = vmatprep.subr.mxu0 0.0
    %376 = vmatpush1.xpose.msra.mxu0 0.0
    %377 = vmatprep.subr.mxu0 0.0
    %378 = vmatpush1.xpose.msra.mxu0 0.0
    %379 = vmatprep.subr.mxu0 0.0
    %380 = vmatpush1.xpose.msra.mxu0 0.0
    %381 = vmatprep.subr.mxu0 0.0
    %382 = vmatpush1.xpose.msra.mxu0 0.0
    %383 = vmatprep.subr.mxu0 0.0
    %384 = vmatpush1.xpose.msra.mxu0 0.0
    %385 = vmatprep.subr.mxu0 0.0
    %386 = vmatpush1.xpose.msra.mxu0 0.0
    %387 = vmatprep.subr.mxu0 0.0
    %388 = vmatpush1.xpose.msra.mxu0 0.0
    %389 = vmatprep.subr.mxu0 0.0
    %390 = vmatpush1.xpose.msra.mxu0 0.0
    %391 = vmatprep.subr.mxu0 0.0
    %392 = vmatpush1.xpose.msra.mxu0 0.0
    %393 = vmatprep.subr.mxu0 0.0
    %394 = vmatpush1.xpose.msra.mxu0 0.0
    %395 = vmatprep.subr.mxu0 0.0
    %396 = vmatpush1.xpose.msra.mxu0 0.0
    %397 = vmatprep.subr.mxu0 0.0
    %398 = vmatpush1.xpose.msra.mxu0 0.0
    %399 = vmatprep.subr.mxu0 0.0
    %400 = vmatpush1.xpose.msra.mxu0 0.0
    %401 = vmatprep.subr.mxu0 0.0
    %402 = vmatpush1.xpose.msra.mxu0 0.0
    %403 = vmatprep.subr.mxu0 0.0
    %404 = vmatpush1.xpose.msra.mxu0 0.0
    %405 = vmatprep.subr.mxu0 0.0
    %406 = vmatpush1.xpose.msra.mxu0 0.0
    %407 = vmatprep.subr.mxu0 0.0
    %408 = vmatpush1.xpose.msra.mxu0 0.0
    %409 = vmatprep.subr.mxu0 0.0
    %410 = vmatpush1.xpose.msra.mxu0 0.0
    %411 = vmatprep.subr.mxu0 0.0
    %412 = vmatpush1.xpose.msra.mxu0 0.0
    %413 = vmatprep.subr.mxu0 0.0
    %414 = vmatpush1.xpose.msra.mxu0 0.0
    %415 = vmatprep.subr.mxu0 0.0
    %416 = vmatpush1.xpose.msra.mxu0 0.0
    %417 = vmatprep.subr.mxu0 0.0
    %418 = vmatpush1.xpose.msra.mxu0 0.0
    %419 = vmatprep.subr.mxu0 0.0
    %420 = vmatpush1.xpose.msra.mxu0 0.0
    %421 = vmatprep.subr.mxu0 0.0
    %422 = vmatpush1.xpose.msra.mxu0 0.0
    %423 = vmatprep.subr.mxu0 0.0
    %424 = vmatpush1.xpose.msra.mxu0 0.0
    %425 = vmatprep.subr.mxu0 0.0
    %426 = vmatpush1.xpose.msra.mxu0 0.0
    %427 = vmatprep.subr.mxu0 0.0
    %428 = vmatpush1.xpose.msra.mxu0 0.0
    %429 = vmatprep.subr.mxu0 0.0
    %430 = vmatpush1.xpose.msra.mxu0 0.0
    %431 = vmatprep.subr.mxu0 0.0
    %432 = vmatpush1.xpose.msra.mxu0 0.0
    %433 = vmatprep.mubr.f32.mxu0 0.0
    %434 = vmatmul.mubr.f32.gmra.mrb[0].mxu0 %v365
    %v435 = vpop.f32.mrb[0].mxu0
    %v436 = vadd.f32 0.0, %v435
    %v437 = vpop.f32.mrb[0].mxu0
    %438 = vdwg.mxu0
    %v439 = vmul.f32 %v436, 0.17677669
    %vm440 = vcmask 64512
    %v441 = vsel %vm440, %v439, -inf
    %442 = vmax.xlane.f32.xlu0 %v441
    %v443 = vpop.xlane.xlu0 %442
    %v444 = vsub.f32 %v439, %v443
    %v445 = vmul.f32 %v444, 1.442695
    %v446 = vpow.pop %v445
    %v447 = vsel %vm440, %v446, 0.0
    %448 = vadd.xlane.f32.xlu0 %v447
    %v449 = vpop.xlane.xlu0 %448
    %v450 = vrcp.pop %v449
    %v451 = vmul.f32 %v446, %v450
    %v453 = vsel %vm440, %v451, 0
    %455 = vmatprep.subr.mxu0 0.0
    %456 = vmatpush1.msra.mxu0 %v54
    %457 = vmatprep.subr.mxu0 0.0
    %458 = vmatpush1.msra.mxu0 0.0
    %459 = vmatprep.subr.mxu0 0.0
    %460 = vmatpush1.msra.mxu0 0.0
    %461 = vmatprep.subr.mxu0 0.0
    %462 = vmatpush1.msra.mxu0 0.0
    %463 = vmatprep.subr.mxu0 0.0
    %464 = vmatpush1.msra.mxu0 0.0
    %465 = vmatprep.subr.mxu0 0.0
    %466 = vmatpush1.msra.mxu0 0.0
    %467 = vmatprep.subr.mxu0 0.0
    %468 = vmatpush1.msra.mxu0 0.0
    %469 = vmatprep.subr.mxu0 0.0
    %470 = vmatpush1.msra.mxu0 0.0
    %471 = vmatprep.subr.mxu0 0.0
    %472 = vmatpush1.msra.mxu0 0.0
    %473 = vmatprep.subr.mxu0 0.0
    %474 = vmatpush1.msra.mxu0 0.0
    %475 = vmatprep.subr.mxu0 0.0
    %476 = vmatpush1.msra.mxu0 0.0
    %477 = vmatprep.subr.mxu0 0.0
    %478 = vmatpush1.msra.mxu0 0.0
    %479 = vmatprep.subr.mxu0 0.0
    %480 = vmatpush1.msra.mxu0 0.0
    %481 = vmatprep.subr.mxu0 0.0
    %482 = vmatpush1.msra.mxu0 0.0
    %483 = vmatprep.subr.mxu0 0.0
    %484 = vmatpush1.msra.mxu0 0.0
    %485 = vmatprep.subr.mxu0 0.0
    %486 = vmatpush1.msra.mxu0 0.0
    %487 = vmatprep.subr.mxu0 0.0
    %488 = vmatpush1.msra.mxu0 0.0
    %489 = vmatprep.subr.mxu0 0.0
    %490 = vmatpush1.msra.mxu0 0.0
    %491 = vmatprep.subr.mxu0 0.0
    %492 = vmatpush1.msra.mxu0 0.0
    %493 = vmatprep.subr.mxu0 0.0
    %494 = vmatpush1.msra.mxu0 0.0
    %495 = vmatprep.subr.mxu0 0.0
    %496 = vmatpush1.msra.mxu0 0.0
    %497 = vmatprep.subr.mxu0 0.0
    %498 = vmatpush1.msra.mxu0 0.0
    %499 = vmatprep.subr.mxu0 0.0
    %500 = vmatpush1.msra.mxu0 0.0
    %501 = vmatprep.subr.mxu0 0.0
    %502 = vmatpush1.msra.mxu0 0.0
    %503 = vmatprep.subr.mxu0 0.0
    %504 = vmatpush1.msra.mxu0 0.0
    %505 = vmatprep.subr.mxu0 0.0
    %506 = vmatpush1.msra.mxu0 0.0
    %507 = vmatprep.subr.mxu0 0.0
    %508 = vmatpush1.msra.mxu0 0.0
    %509 = vmatprep.subr.mxu0 0.0
    %510 = vmatpush1.msra.mxu0 0.0
    %511 = vmatprep.subr.mxu0 0.0
    %512 = vmatpush1.msra.mxu0 0.0
    %513 = vmatprep.subr.mxu0 0.0
    %514 = vmatpush1.msra.mxu0 0.0
    %515 = vmatprep.subr.mxu0 0.0
    %516 = vmatpush1.msra.mxu0 0.0
    %517 = vmatprep.subr.mxu0 0.0
    %518 = vmatpush1.msra.mxu0 0.0
    %519 = vmatprep.mubr.f32.mxu0 0.0
    %520 = vmatmul.mubr.f32.gmra.mrb[0].mxu0 %v453
    %v521 = vpop.f32.mrb[0].mxu0
    %v522 = vadd.f32 0.0, %v521
    %v523 = vpop.f32.mrb[0].mxu0
    %524 = vdwg.mxu0
    %525 = vrot.lane.b32.xlu0 %v359, 32
    %v526 = vpop.permute.xlu0 %525
    %v528 = vsel %vm82, %v522, %v526
    %vm529 = vcmask 785408
    %530 = vst.msk [vmem:[%s3] sm:$0xff] %vm529, %v528
    %531 = vst.msk [vmem:[#allocation8] sm:$0xff] %vm440, %v439
    // Predicated region
    $region26: #{clusterer_forward.1} parent=1 // pred_check
      _
    $region27: #{clusterer_forward.1} parent=1 // pred_check_branch
      %533 = sbr.rel (0) target = $region29
    $region28: #{clusterer_forward.1} parent=1 // pred_region
      _
    $region29: #{clusterer_forward.1} parent=1 // pred_fallthru
      _
    // Predicated region
    $region30: #{clusterer_forward.1} parent=1 // pred_check
      _
    $region31: #{clusterer_forward.1} parent=1 // pred_check_branch
      %535 = sbr.rel (0) target = $region33
    $region32: #{clusterer_forward.1} parent=1 // pred_region
      %s537 = ssub.s32 128, 128
      %538 = vsyncadd [#allocation4], %s537
      %s540 = sshll.u32 [#allocation8], 4
      %s541 = int_to_ptr.vmem [resolvable:$true] %s540
      %543 = dma.vmem_to_hbm [thread:$0]  %s541, 128, %s4, [#allocation4]
    $region33: #{clusterer_forward.1} parent=1 // pred_fallthru
      _
    // Predicated region
    $region34: #{clusterer_forward.1} parent=1 // pred_check
      _
    $region35: #{clusterer_forward.1} parent=1 // pred_check_branch
      %545 = sbr.rel (0) target = $region37
    $region36: #{clusterer_forward.1} parent=1 // pred_region
      _
    $region37: #{clusterer_forward.1} parent=1 // pred_fallthru
      _
    // Predicated region
    $region38: #{clusterer_forward.1} parent=1 // pred_check
      _
    $region39: #{clusterer_forward.1} parent=1 // pred_check_branch
      %547 = sbr.rel (0) target = $region41
    $region40: #{clusterer_forward.1} parent=1 // pred_region
      %548 = dma.done [#allocation4], 128
    $region41: #{clusterer_forward.1} parent=1 // pred_fallthru
      _
    %549 = vsyncpa [#allocation3], 1
    %550 = vsyncpa [#allocation6], 1
    %551 = vsyncpa [#allocation4], 1

</llo_original>
